<compile_context>
chip_gen: v5e
topology: v5e:2x2
jax: 0.10.0
libtpu: 0.0.40
codegen_flags: <defaults>
</compile_context>

<pallas_src>
import jax
import jax.numpy as jnp
from jax.experimental import pallas as pl
from jax.experimental.pallas import tpu as pltpu


def _round_up(x, m):
    return ((x + m - 1) // m) * m


def projection_head_kernel(x_ref, w1_ref, b1_ref, w2_ref, b2_ref, o_ref):
    # x_ref:  (TB, H)      f32  (cast to bf16 in-kernel, right before the MXU)
    # w1_ref: (H, HID)     bf16    b1_ref: (1, HID)    f32
    # w2_ref: (HID, OUT_P) bf16    b2_ref: (1, OUT_P)  f32
    # o_ref:  (TB, OUT_P)  f32
    x = x_ref[...].astype(jnp.bfloat16)
    h = jnp.dot(x, w1_ref[...], preferred_element_type=jnp.float32)
    h = jnp.maximum(h + b1_ref[...], 0.0)          # bias + ReLU in f32
    h = h.astype(jnp.bfloat16)                     # bf16 LHS for fc2 MXU pass
    out = jnp.dot(h, w2_ref[...], preferred_element_type=jnp.float32)
    o_ref[...] = (out + b2_ref[...]).astype(o_ref.dtype)


def projection_head(x, w1, b1, w2, b2, *, tile_b=512):
    """Fused fc1 -> ReLU -> fc2.

    x:  [B, H] float32
    w1: [H, 256], b1: [256] or [1, 256]
    w2: [256, OUT], b2: [OUT] or [1, OUT]
    Returns [B, OUT] float32.
    """
    B, H = x.shape
    HID = w1.shape[1]
    OUT = w2.shape[1]

    SUB = 8                                    # f32 sublane multiple
    OUT_P = max(_round_up(OUT, 128), 128)      # lane-dense output (unmasked vst)

    # ---- batch tile: sublane-aligned, >= 2 grid steps when the batch allows
    B_sub = _round_up(B, SUB)
    if B_sub <= 2 * SUB:
        tile = B_sub                           # tiny batch: single small step
    else:
        tile = min(tile_b, _round_up(pl.cdiv(B_sub, 2), SUB))

    # ---- VMEM budget (v7x: 64 MiB physical, 32 MiB default scoped) ----------
    VMEM_LIMIT = 32 * 1024 * 1024
    VMEM_BUDGET = 24 * 1024 * 1024             # headroom for compiler scratch
    resident = H * HID * 2 + HID * OUT_P * 2 + (HID + OUT_P) * 4   # weights/biases
    per_row = 3 * H * 4 + 2 * OUT_P * 4        # (<=3)-buffered f32 x + 2x f32 out
    max_tile = max(SUB, ((VMEM_BUDGET - resident) // per_row) // SUB * SUB)
    tile = max(SUB, min(tile, max_tile))

    B_P = _round_up(B_sub, tile)
    grid = (B_P // tile,)

    # Deeper x pipeline only when per-step DMA is tiny and there are enough steps.
    use_deep_x = grid[0] >= 3 and (tile * H * 4) <= 512 * 1024
    if use_deep_x:
        x_spec = pl.BlockSpec((tile, H), lambda i: (i, 0),
                              pipeline_mode=pl.Buffered(3))
    else:
        x_spec = pl.BlockSpec((tile, H), lambda i: (i, 0))

    # ---- operands: stream f32 x directly; pad only when actually needed -----
    x_p = x if B_P == B else jnp.zeros((B_P, H), x.dtype).at[:B, :].set(x)
    w1_b = w1.astype(jnp.bfloat16)
    b1_r = b1.reshape(1, HID).astype(jnp.float32)
    if OUT_P == OUT:
        w2_p = w2.astype(jnp.bfloat16)
        b2_p = b2.reshape(1, OUT).astype(jnp.float32)
    else:
        w2_p = jnp.zeros((HID, OUT_P), jnp.bfloat16).at[:, :OUT].set(
            w2.astype(jnp.bfloat16))
        b2_p = jnp.zeros((1, OUT_P), jnp.float32).at[:, :OUT].set(
            b2.reshape(1, OUT).astype(jnp.float32))

    out = pl.pallas_call(
        projection_head_kernel,
        out_shape=jax.ShapeDtypeStruct((B_P, OUT_P), jnp.float32),
        grid=grid,
        in_specs=[
            x_spec,                                         # x tile (streamed)
            pl.BlockSpec((H, HID), lambda i: (0, 0)),       # W1 (VMEM-resident)
            pl.BlockSpec((1, HID), lambda i: (0, 0)),       # b1
            pl.BlockSpec((HID, OUT_P), lambda i: (0, 0)),   # W2
            pl.BlockSpec((1, OUT_P), lambda i: (0, 0)),     # b2
        ],
        out_specs=pl.BlockSpec((tile, OUT_P), lambda i: (i, 0)),
        compiler_params=pltpu.CompilerParams(
            dimension_semantics=("parallel",),
            vmem_limit_bytes=VMEM_LIMIT,
        ),
    )(x_p, w1_b, b1_r, w2_p, b2_p)

    if B_P != B or OUT_P != OUT:
        out = out[:B, :OUT]
    return out


def reference(x, w1, b1, w2, b2):
    h = jnp.maximum(x @ w1 + b1.reshape(1, -1), 0.0)
    return h @ w2 + b2.reshape(1, -1)


if __name__ == "__main__":
    # Shapes implied by the module: rnn_hidden_dim -> 256 -> projection_out_dim.
    # B deliberately NOT sublane-aligned to exercise the ragged path.
    B = 10
    RNN_HIDDEN_DIM = 32
    HIDDEN = 256
    PROJECTION_OUT_DIM = 128

    key = jax.random.PRNGKey(0)
    kx, k1, kb1, k2, kb2 = jax.random.split(key, 5)

    x = jax.random.normal(kx, (B, RNN_HIDDEN_DIM), dtype=jnp.float32)

    # nn.Linear weights stored transposed ([in, out]) relative to PyTorch.
    w1 = jax.random.normal(k1, (RNN_HIDDEN_DIM, HIDDEN), dtype=jnp.float32) * 0.05
    b1 = jax.random.normal(kb1, (HIDDEN,), dtype=jnp.float32) * 0.05
    w2 = jax.random.normal(k2, (HIDDEN, PROJECTION_OUT_DIM), dtype=jnp.float32) * 0.05
    b2 = jax.random.normal(kb2, (PROJECTION_OUT_DIM,), dtype=jnp.float32) * 0.05

    out = projection_head(x, w1, b1, w2, b2)
    out = jax.block_until_ready(out)

    ref = reference(x, w1, b1, w2, b2)
    assert out.shape == (B, PROJECTION_OUT_DIM), out.shape
    # bf16 MXU inputs with f32 accumulation -> relaxed tolerance vs f32 reference.
    err = float(jnp.max(jnp.abs(out - ref)))
    scale = float(jnp.max(jnp.abs(ref))) + 1e-6
    assert err / scale < 2e-2, f"mismatch vs reference: rel err {err / scale:.3e}"

    print("KERNEL_OK")
</pallas_src>

<mosaic_0001>
module attributes {stable_mosaic.version = 11 : i64} {
  func.func @projection_head_kernel(%arg0: i32, %arg1: memref<16x32xf32, #tpu.memory_space<vmem>>, %arg2: memref<32x256xbf16, #tpu.memory_space<vmem>>, %arg3: memref<1x256xf32, #tpu.memory_space<vmem>>, %arg4: memref<256x128xbf16, #tpu.memory_space<vmem>>, %arg5: memref<1x128xf32, #tpu.memory_space<vmem>>, %arg6: memref<16x128xf32, #tpu.memory_space<vmem>>) attributes {dimension_semantics = [#tpu.dimension_semantics<parallel>], iteration_bounds = array<i64: 1>, scalar_prefetch = 0 : i64, scratch_operands = 0 : i64, tpu.core_type = #tpu.core_type<tc>, window_params = [{transform_indices = @transform_0, window_bounds = array<i64: 16, 32>}, {pipeline_mode = #tpu.pipeline_mode<synchronous>, transform_indices = @transform_1, window_bounds = array<i64: 32, 256>}, {pipeline_mode = #tpu.pipeline_mode<synchronous>, transform_indices = @transform_2, window_bounds = array<i64: 1, 256>}, {pipeline_mode = #tpu.pipeline_mode<synchronous>, transform_indices = @transform_3, window_bounds = array<i64: 256, 128>}, {pipeline_mode = #tpu.pipeline_mode<synchronous>, transform_indices = @transform_4, window_bounds = array<i64: 1, 128>}, {transform_indices = @transform_5, window_bounds = array<i64: 16, 128>}]} {
    %c0 = arith.constant 0 : index
    %c0_0 = arith.constant 0 : index
    %0 = vector.load %arg1[%c0, %c0_0] : memref<16x32xf32, #tpu.memory_space<vmem>>, vector<16x32xf32>
    %1 = arith.truncf %0 : vector<16x32xf32> to vector<16x32xbf16>
    %c0_1 = arith.constant 0 : index
    %c0_2 = arith.constant 0 : index
    %2 = vector.load %arg2[%c0_1, %c0_2] : memref<32x256xbf16, #tpu.memory_space<vmem>>, vector<32x256xbf16>
    %cst = arith.constant dense<0.000000e+00> : vector<16x256xf32>
    %3 = tpu.matmul %1, %2, %cst {dimension_numbers = #tpu.dot_dimension_numbers<[1], [0], [0], [1], [0, 0, 1, 1], [], []>} : vector<16x32xbf16>, vector<32x256xbf16>, vector<16x256xf32> -> vector<16x256xf32>
    %c0_3 = arith.constant 0 : index
    %c0_4 = arith.constant 0 : index
    %4 = vector.load %arg3[%c0_3, %c0_4] : memref<1x256xf32, #tpu.memory_space<vmem>>, vector<1x256xf32>
    %5 = vector.broadcast %4 : vector<1x256xf32> to vector<16x256xf32>
    %6 = arith.addf %3, %5 : vector<16x256xf32>
    %cst_5 = arith.constant 0.000000e+00 : f32
    %7 = vector.broadcast %cst_5 : f32 to vector<16x256xf32>
    %8 = arith.maximumf %6, %7 : vector<16x256xf32>
    %9 = arith.truncf %8 : vector<16x256xf32> to vector<16x256xbf16>
    %c0_6 = arith.constant 0 : index
    %c0_7 = arith.constant 0 : index
    %10 = vector.load %arg4[%c0_6, %c0_7] : memref<256x128xbf16, #tpu.memory_space<vmem>>, vector<256x128xbf16>
    %cst_8 = arith.constant dense<0.000000e+00> : vector<16x128xf32>
    %11 = tpu.matmul %9, %10, %cst_8 {dimension_numbers = #tpu.dot_dimension_numbers<[1], [0], [0], [1], [0, 0, 1, 1], [], []>} : vector<16x256xbf16>, vector<256x128xbf16>, vector<16x128xf32> -> vector<16x128xf32>
    %c0_9 = arith.constant 0 : index
    %c0_10 = arith.constant 0 : index
    %12 = vector.load %arg5[%c0_9, %c0_10] : memref<1x128xf32, #tpu.memory_space<vmem>>, vector<1x128xf32>
    %13 = vector.broadcast %12 : vector<1x128xf32> to vector<16x128xf32>
    %14 = arith.addf %11, %13 : vector<16x128xf32>
    %c0_11 = arith.constant 0 : index
    %c0_12 = arith.constant 0 : index
    %15 = vector.load %arg6[%c0_11, %c0_12] : memref<16x128xf32, #tpu.memory_space<vmem>>, vector<16x128xf32>
    tpu.vector_store %arg6[%c0_11, %c0_12], %14 {strides = array<i32>} : memref<16x128xf32, #tpu.memory_space<vmem>>, vector<16x128xf32>,
    return
  }
  func.func @transform_0(%arg0: i32) -> (i32, i32) {
    %c0_i32 = arith.constant 0 : i32
    %c0_i32_0 = arith.constant 0 : i32
    return %arg0, %c0_i32 : i32, i32
  }
  func.func @transform_1(%arg0: i32) -> (i32, i32) {
    %c0_i32 = arith.constant 0 : i32
    %c0_i32_0 = arith.constant 0 : i32
    %c0_i32_1 = arith.constant 0 : i32
    return %c0_i32, %c0_i32_0 : i32, i32
  }
  func.func @transform_2(%arg0: i32) -> (i32, i32) {
    %c0_i32 = arith.constant 0 : i32
    %c0_i32_0 = arith.constant 0 : i32
    %c0_i32_1 = arith.constant 0 : i32
    return %c0_i32, %c0_i32_0 : i32, i32
  }
  func.func @transform_3(%arg0: i32) -> (i32, i32) {
    %c0_i32 = arith.constant 0 : i32
    %c0_i32_0 = arith.constant 0 : i32
    %c0_i32_1 = arith.constant 0 : i32
    return %c0_i32, %c0_i32_0 : i32, i32
  }
  func.func @transform_4(%arg0: i32) -> (i32, i32) {
    %c0_i32 = arith.constant 0 : i32
    %c0_i32_0 = arith.constant 0 : i32
    %c0_i32_1 = arith.constant 0 : i32
    return %c0_i32, %c0_i32_0 : i32, i32
  }
  func.func @transform_5(%arg0: i32) -> (i32, i32) {
    %c0_i32 = arith.constant 0 : i32
    %c0_i32_0 = arith.constant 0 : i32
    return %arg0, %c0_i32 : i32, i32
  }
}

</mosaic_0001>

<llo_original>
// kernel: tpu_custom_call.1
$region0: #{tpu_custom_call.1}
  #allocation0 [shape = 'u32[]', space=smem, size = 0x4, offset = 0x4, fixed_abs, tag = 'smem constant byte address 0x4 - core index']
  #allocation1 [shape = 'u32[72,128]{1,0:T(1,128)}', space=vmem, size = 0x9000, scoped, tag = 'internal scratch']
  %s0 = inlined_call_operand.hbm [shape: f32[16,32], index: 0, kind: input, shape index: {}]
  %s1 = inlined_call_operand.hbm [shape: bf16[32,256], index: 1, kind: input, shape index: {}]
  %s2 = inlined_call_operand.hbm [shape: f32[1,256], index: 2, kind: input, shape index: {}]
  %s3 = inlined_call_operand.hbm [shape: bf16[256,128], index: 3, kind: input, shape index: {}]
  %s4 = inlined_call_operand.vmem [shape: f32[1,128], index: 4, kind: input, shape index: {}]
  %s5 = inlined_call_operand.hbm [shape: f32[16,128], index: 5, kind: output, shape index: {}]
  %s6 = sld [smem:[#allocation0]]
  $region46: #{tpu_custom_call.1} parent=0
    _
  %s8 = ssub.s32 1, %s6
  %s9 = scalar_select 0, %s8, %s6
  $region1: #{tpu_custom_call.1} parent=0
    #allocation2 [shape = 'u8[8192]{0}', space=vmem, size = 0x2000, scoped, tag = 'input window, operand 0, single buffered']
    #allocation3 [shape = 's32[1]{0}', space=sflag, size = 0x4, scoped, tag = 'scoped memory for tpu_custom_call.1']
    #allocation4 [shape = 's32[1]{0}', space=sflag, size = 0x4, scoped, tag = 'scoped memory for tpu_custom_call.1']
    #allocation5 [shape = 'u8[16384]{0}', space=vmem, size = 0x4000, scoped, tag = 'input window, operand 1, single buffered']
    #allocation6 [shape = 's32[1]{0}', space=sflag, size = 0x4, scoped, tag = 'scoped memory for tpu_custom_call.1']
    #allocation7 [shape = 'u8[1024]{0}', space=vmem, size = 0x400, scoped, tag = 'input window, operand 2, single buffered']
    #allocation8 [shape = 'u8[65536]{0}', space=vmem, size = 0x10000, scoped, tag = 'input window, operand 3, single buffered']
    #allocation9 [shape = 's32[1]{0}', space=sflag, size = 0x4, scoped, tag = 'scoped memory for tpu_custom_call.1']
    #allocation10 [shape = 'u8[8192]{0}', space=vmem, size = 0x2000, scoped, tag = 'output window, operand 0, single buffered']
    %10 = vsyncpa [#allocation3], 0
    %11 = vsyncpa [#allocation6], 0
    %12 = vsyncpa [#allocation9], 0
    %13 = vsyncpa [#allocation4], 0
    // Predicated region
    $region2: #{tpu_custom_call.1} parent=1 // pred_check
      _
    $region3: #{tpu_custom_call.1} parent=1 // pred_check_branch
      %15 = sbr.rel (0) target = $region5
    $region4: #{tpu_custom_call.1} parent=1 // pred_region
      %17 = vsyncadd [#allocation3], 0
      %s18 = sshll.u32 %s0, 4
      %s19 = int_to_ptr.hbm [resolvable:$true] %s18
      %s20 = sshll.u32 [#allocation2], 4
      %s21 = int_to_ptr.vmem [resolvable:$true] %s20
      %26 = dma.hbm_to_vmem [thread:$0]  %s19, 256, %s21, [#allocation3], 128, 128, 8
    $region5: #{tpu_custom_call.1} parent=1 // pred_fallthru
      _
    // Predicated region
    $region6: #{tpu_custom_call.1} parent=1 // pred_check
      _
    $region7: #{tpu_custom_call.1} parent=1 // pred_check_branch
      %28 = sbr.rel (0) target = $region9
    $region8: #{tpu_custom_call.1} parent=1 // pred_region
      %30 = vsyncadd [#allocation6], 0
      %s31 = sshll.u32 %s1, 4
      %s32 = int_to_ptr.hbm [resolvable:$true] %s31
      %s33 = sshll.u32 [#allocation5], 4
      %s34 = int_to_ptr.vmem [resolvable:$true] %s33
      %39 = dma.hbm_to_vmem [thread:$0]  %s32, 512, %s34, [#allocation6], 128, 128, 8
    $region9: #{tpu_custom_call.1} parent=1 // pred_fallthru
      _
    // Predicated region
    $region10: #{tpu_custom_call.1} parent=1 // pred_check
      _
    $region11: #{tpu_custom_call.1} parent=1 // pred_check_branch
      %41 = sbr.rel (0) target = $region13
    $region12: #{tpu_custom_call.1} parent=1 // pred_region
      %43 = vsyncadd [#allocation6], 0
      %s45 = sshll.u32 %s2, 4
      %s46 = int_to_ptr.hbm [resolvable:$true] %s45
      %s47 = sshll.u32 [#allocation7], 4
      %s48 = int_to_ptr.vmem [resolvable:$true] %s47
      %50 = dma.hbm_to_vmem [thread:$0]  %s46, 32, %s48, [#allocation6]
    $region13: #{tpu_custom_call.1} parent=1 // pred_fallthru
      _
    // Predicated region
    $region14: #{tpu_custom_call.1} parent=1 // pred_check
      _
    $region15: #{tpu_custom_call.1} parent=1 // pred_check_branch
      %52 = sbr.rel (0) target = $region17
    $region16: #{tpu_custom_call.1} parent=1 // pred_region
      %54 = vsyncadd [#allocation9], 0
      %s55 = sshll.u32 %s3, 4
      %s56 = int_to_ptr.hbm [resolvable:$true] %s55
      %s57 = sshll.u32 [#allocation8], 4
      %s58 = int_to_ptr.vmem [resolvable:$true] %s57
      %63 = dma.hbm_to_vmem [thread:$0]  %s56, 2048, %s58, [#allocation9], 64, 64, 4
    $region17: #{tpu_custom_call.1} parent=1 // pred_fallthru
      _
    // Predicated region
    $region18: #{tpu_custom_call.1} parent=1 // pred_check
      _
    $region19: #{tpu_custom_call.1} parent=1 // pred_check_branch
      %65 = sbr.rel (0) target = $region21
    $region20: #{tpu_custom_call.1} parent=1 // pred_region
      _
    $region21: #{tpu_custom_call.1} parent=1 // pred_fallthru
      _
    // Predicated region
    $region22: #{tpu_custom_call.1} parent=1 // pred_check
      _
    $region23: #{tpu_custom_call.1} parent=1 // pred_check_branch
      %67 = sbr.rel (0) target = $region25
    $region24: #{tpu_custom_call.1} parent=1 // pred_region
      %69 = dma.done [#allocation3], 256
    $region25: #{tpu_custom_call.1} parent=1 // pred_fallthru
      _
    // Predicated region
    $region26: #{tpu_custom_call.1} parent=1 // pred_check
      _
    $region27: #{tpu_custom_call.1} parent=1 // pred_check_branch
      %71 = sbr.rel (0) target = $region29
    $region28: #{tpu_custom_call.1} parent=1 // pred_region
      %73 = dma.done [#allocation6], 512
    $region29: #{tpu_custom_call.1} parent=1 // pred_fallthru
      _
    // Predicated region
    $region30: #{tpu_custom_call.1} parent=1 // pred_check
      _
    $region31: #{tpu_custom_call.1} parent=1 // pred_check_branch
      %75 = sbr.rel (0) target = $region33
    $region32: #{tpu_custom_call.1} parent=1 // pred_region
      %77 = dma.done [#allocation6], 32
    $region33: #{tpu_custom_call.1} parent=1 // pred_fallthru
      _
    // Predicated region
    $region34: #{tpu_custom_call.1} parent=1 // pred_check
      _
    $region35: #{tpu_custom_call.1} parent=1 // pred_check_branch
      %79 = sbr.rel (0) target = $region37
    $region36: #{tpu_custom_call.1} parent=1 // pred_region
      %81 = dma.done [#allocation9], 2048
    $region37: #{tpu_custom_call.1} parent=1 // pred_fallthru
      _
    %v83 = vld [vmem:[#allocation2] sm:$0xff]
    %v84 = vld [vmem:[#allocation2 + $0x8] sm:$0xff]
    %v85 = vpack.c.bf16 %v84, %v83
    %v86 = vld [vmem:[#allocation5] sm:$0xff]
    %v87 = vld [vmem:[#allocation5 + $0x8] sm:$0xff]
    %v88 = vld [vmem:[#allocation5 + $0x10] sm:$0xff]
    %v89 = vld [vmem:[#allocation5 + $0x18] sm:$0xff]
    %v90 = vld [vmem:[#allocation7] sm:$0x3]
    %v92 = vperm.slane %v90, 0
    %v93 = vperm.slane %v90, 1
    %v100 = vunpack.c.l.b16 %v86
    %v101 = vunpack.c.h.b16 %v86
    %v102 = vunpack.c.l.b16 %v87
    %v103 = vunpack.c.h.b16 %v87
    %v104 = vunpack.c.l.b16 %v88
    %v105 = vunpack.c.h.b16 %v88
    %v106 = vunpack.c.l.b16 %v89
    %v107 = vunpack.c.h.b16 %v89
    %v108 = vpack.c.b16 %v102, %v100
    %v109 = vpack.c.b16 %v103, %v101
    %v110 = vpack.c.b16 %v106, %v104
    %v111 = vpack.c.b16 %v107, %v105
    %vm116 = vcmask 261120
    %v118 = vsel %vm116, %v85, 0
    %120 = vmatpush.bf16.msra.mxu0 0
    %121 = vmatpush.bf16.msra.mxu0 0
    %122 = vmatpush.bf16.msra.mxu0 0
    %123 = vmatpush.bf16.msra.mxu0 0
    %124 = vmatpush.bf16.msra.mxu0 0
    %125 = vmatpush.bf16.msra.mxu0 0
    %126 = vmatpush.bf16.msra.mxu0 %v110
    %127 = vmatpush.bf16.msra.mxu0 %v108
    %128 = vmatmul.bf16.gmra.mxu0 %v118
    %v129 = vpop.f32.mrf.mxu0
    %v130 = vadd.f32 %v92, %v129
    %v131 = vpop.f32.mrf.mxu0
    %v132 = vadd.f32 %v92, %v131
    %133 = vdwg.mxu0
    %134 = vmatpush.bf16.msra.mxu0 0
    %135 = vmatpush.bf16.msra.mxu0 0
    %136 = vmatpush.bf16.msra.mxu0 0
    %137 = vmatpush.bf16.msra.mxu0 0
    %138 = vmatpush.bf16.msra.mxu0 0
    %139 = vmatpush.bf16.msra.mxu0 0
    %140 = vmatpush.bf16.msra.mxu0 %v111
    %141 = vmatpush.bf16.msra.mxu0 %v109
    %142 = vmatmul.bf16.gmra.mxu0 %v118
    %v143 = vpop.f32.mrf.mxu0
    %v144 = vadd.f32 %v93, %v143
    %v145 = vpop.f32.mrf.mxu0
    %v146 = vadd.f32 %v93, %v145
    %147 = vdwg.mxu0
    %v148 = vmax.f32 %v130, 0.0
    %v149 = vmax.f32 %v144, 0.0
    %v150 = vmax.f32 %v132, 0.0
    %v151 = vmax.f32 %v146, 0.0
    %v152 = vpack.c.bf16 %v150, %v148
    %v153 = vpack.c.bf16 %v151, %v149
    %v154 = vld [vmem:[#allocation8] sm:$0xf]
    %v155 = vld [vmem:[#allocation8 + $0x4] sm:$0xf]
    %v156 = vld [vmem:[#allocation8 + $0x8] sm:$0xf]
    %v157 = vld [vmem:[#allocation8 + $0xc] sm:$0xf]
    %v158 = vld [vmem:[#allocation8 + $0x10] sm:$0xf]
    %v159 = vld [vmem:[#allocation8 + $0x14] sm:$0xf]
    %v160 = vld [vmem:[#allocation8 + $0x18] sm:$0xf]
    %v161 = vld [vmem:[#allocation8 + $0x1c] sm:$0xf]
    %v162 = vld [vmem:[#allocation8 + $0x20] sm:$0xf]
    %v163 = vld [vmem:[#allocation8 + $0x24] sm:$0xf]
    %v164 = vld [vmem:[#allocation8 + $0x28] sm:$0xf]
    %v165 = vld [vmem:[#allocation8 + $0x2c] sm:$0xf]
    %v166 = vld [vmem:[#allocation8 + $0x30] sm:$0xf]
    %v167 = vld [vmem:[#allocation8 + $0x34] sm:$0xf]
    %v168 = vld [vmem:[#allocation8 + $0x38] sm:$0xf]
    %v169 = vld [vmem:[#allocation8 + $0x3c] sm:$0xf]
    %v170 = vld [vmem:[#allocation8 + $0x40] sm:$0xf]
    %v171 = vld [vmem:[#allocation8 + $0x44] sm:$0xf]
    %v172 = vld [vmem:[#allocation8 + $0x48] sm:$0xf]
    %v173 = vld [vmem:[#allocation8 + $0x4c] sm:$0xf]
    %v174 = vld [vmem:[#allocation8 + $0x50] sm:$0xf]
    %v175 = vld [vmem:[#allocation8 + $0x54] sm:$0xf]
    %v176 = vld [vmem:[#allocation8 + $0x58] sm:$0xf]
    %v177 = vld [vmem:[#allocation8 + $0x5c] sm:$0xf]
    %v178 = vld [vmem:[#allocation8 + $0x60] sm:$0xf]
    %v179 = vld [vmem:[#allocation8 + $0x64] sm:$0xf]
    %v180 = vld [vmem:[#allocation8 + $0x68] sm:$0xf]
    %v181 = vld [vmem:[#allocation8 + $0x6c] sm:$0xf]
    %v182 = vld [vmem:[#allocation8 + $0x70] sm:$0xf]
    %v183 = vld [vmem:[#allocation8 + $0x74] sm:$0xf]
    %v184 = vld [vmem:[#allocation8 + $0x78] sm:$0xf]
    %v185 = vld [vmem:[#allocation8 + $0x7c] sm:$0xf]
    %v186 = vld [vmem:[%s4] sm:$0x1]
    %v188 = vperm.slane %v186, 0
    %v222 = vunpack.c.l.b16 %v154
    %v223 = vunpack.c.l.b16 %v155
    %v224 = vunpack.c.l.b16 %v156
    %v225 = vunpack.c.l.b16 %v157
    %v226 = vunpack.c.l.b16 %v158
    %v227 = vunpack.c.l.b16 %v159
    %v228 = vunpack.c.l.b16 %v160
    %v229 = vunpack.c.l.b16 %v161
    %v230 = vunpack.c.l.b16 %v162
    %v231 = vunpack.c.l.b16 %v163
    %v232 = vunpack.c.l.b16 %v164
    %v233 = vunpack.c.l.b16 %v165
    %v234 = vunpack.c.l.b16 %v166
    %v235 = vunpack.c.l.b16 %v167
    %v236 = vunpack.c.l.b16 %v168
    %v237 = vunpack.c.l.b16 %v169
    %v238 = vunpack.c.l.b16 %v170
    %v239 = vunpack.c.l.b16 %v171
    %v240 = vunpack.c.l.b16 %v172
    %v241 = vunpack.c.l.b16 %v173
    %v242 = vunpack.c.l.b16 %v174
    %v243 = vunpack.c.l.b16 %v175
    %v244 = vunpack.c.l.b16 %v176
    %v245 = vunpack.c.l.b16 %v177
    %v246 = vunpack.c.l.b16 %v178
    %v247 = vunpack.c.l.b16 %v179
    %v248 = vunpack.c.l.b16 %v180
    %v249 = vunpack.c.l.b16 %v181
    %v250 = vunpack.c.l.b16 %v182
    %v251 = vunpack.c.l.b16 %v183
    %v252 = vunpack.c.l.b16 %v184
    %v253 = vunpack.c.l.b16 %v185
    %v254 = vpack.c.b16 %v223, %v222
    %v255 = vpack.c.b16 %v225, %v224
    %v256 = vpack.c.b16 %v227, %v226
    %v257 = vpack.c.b16 %v229, %v228
    %v258 = vpack.c.b16 %v231, %v230
    %v259 = vpack.c.b16 %v233, %v232
    %v260 = vpack.c.b16 %v235, %v234
    %v261 = vpack.c.b16 %v237, %v236
    %v262 = vpack.c.b16 %v239, %v238
    %v263 = vpack.c.b16 %v241, %v240
    %v264 = vpack.c.b16 %v243, %v242
    %v265 = vpack.c.b16 %v245, %v244
    %v266 = vpack.c.b16 %v247, %v246
    %v267 = vpack.c.b16 %v249, %v248
    %v268 = vpack.c.b16 %v251, %v250
    %v269 = vpack.c.b16 %v253, %v252
    %286 = vmatpush.bf16.msra.mxu0 %v261
    %287 = vmatpush.bf16.msra.mxu0 %v260
    %288 = vmatpush.bf16.msra.mxu0 %v259
    %289 = vmatpush.bf16.msra.mxu0 %v258
    %290 = vmatpush.bf16.msra.mxu0 %v257
    %291 = vmatpush.bf16.msra.mxu0 %v256
    %292 = vmatpush.bf16.msra.mxu0 %v255
    %293 = vmatpush.bf16.msra.mxu0 %v254
    %294 = vmatmul.bf16.gmra.mxu0 %v152
    %v295 = vpop.f32.mrf.mxu0
    %v296 = vadd.f32 %v188, %v295
    %v297 = vpop.f32.mrf.mxu0
    %v298 = vadd.f32 %v188, %v297
    %299 = vdwg.mxu0
    %300 = vmatpush.bf16.msra.mxu0 %v269
    %301 = vmatpush.bf16.msra.mxu0 %v268
    %302 = vmatpush.bf16.msra.mxu0 %v267
    %303 = vmatpush.bf16.msra.mxu0 %v266
    %304 = vmatpush.bf16.msra.mxu0 %v265
    %305 = vmatpush.bf16.msra.mxu0 %v264
    %306 = vmatpush.bf16.msra.mxu0 %v263
    %307 = vmatpush.bf16.msra.mxu0 %v262
    %308 = vmatmul.bf16.gmra.mxu0 %v153
    %v309 = vpop.f32.mrf.mxu0
    %v310 = vadd.f32 %v296, %v309
    %v311 = vpop.f32.mrf.mxu0
    %v312 = vadd.f32 %v298, %v311
    %313 = vdwg.mxu0
    %314 = vst [vmem:[#allocation10] sm:$0xff] %v310
    %315 = vst [vmem:[#allocation10 + $0x8] sm:$0xff] %v312
    // Predicated region
    $region38: #{tpu_custom_call.1} parent=1 // pred_check
      _
    $region39: #{tpu_custom_call.1} parent=1 // pred_check_branch
      %317 = sbr.rel (0) target = $region41
    $region40: #{tpu_custom_call.1} parent=1 // pred_region
      %319 = vsyncadd [#allocation4], 0
      %s320 = sshll.u32 [#allocation10], 4
      %s321 = int_to_ptr.vmem [resolvable:$true] %s320
      %s322 = sshll.u32 %s5, 4
      %s323 = int_to_ptr.hbm [resolvable:$true] %s322
      %328 = dma.vmem_to_hbm [thread:$0]  %s321, 256, %s323, [#allocation4], 128, 128, 8
    $region41: #{tpu_custom_call.1} parent=1 // pred_fallthru
      _
    // Predicated region
    $region42: #{tpu_custom_call.1} parent=1 // pred_check
      _
    $region43: #{tpu_custom_call.1} parent=1 // pred_check_branch
      %330 = sbr.rel (0) target = $region45
    $region44: #{tpu_custom_call.1} parent=1 // pred_region
      %332 = dma.done [#allocation4], 256
    $region45: #{tpu_custom_call.1} parent=1 // pred_fallthru
      _
    %333 = vsyncpa [#allocation3], 1
    %334 = vsyncpa [#allocation6], 1
    %335 = vsyncpa [#allocation9], 1
    %336 = vsyncpa [#allocation4], 1

</llo_original>
